<compile_context>
chip_gen: v7x
topology: tpu7x:2x2x1
jax: 0.10.0
libtpu: 0.0.40
codegen_flags: <defaults>
</compile_context>

<pallas_src>
import jax
import jax.numpy as jnp
from jax.experimental import pallas as pl
from jax.experimental.pallas import tpu as pltpu

MXU_DTYPE = jnp.bfloat16   # HBM/matmul operand dtype; accumulation is f32
_WN_EPS = 1e-12


def _round_up(x, m):
    return ((x + m - 1) // m) * m


# ----------------------------------------------------------------------------
# Kernels
# ----------------------------------------------------------------------------
def _linear_full_k_kernel(x_ref, w_ref, b_ref, o_ref):
    """grid = (C_tiles,). x fully VMEM-resident, K collapsed: one dot + bias per tile."""
    o_ref[...] = (
        jax.lax.dot_general(
            x_ref[...], w_ref[...],
            dimension_numbers=(((1,), (1,)), ((), ())),   # contract D axes, no transpose
            preferred_element_type=jnp.float32,
        )
        + b_ref[...]
    ).astype(o_ref.dtype)


def _linear_tiled_kernel(x_ref, w_ref, b_ref, o_ref, acc_ref):
    """grid = (C_tiles, B_tiles, K_tiles); K (reduction) innermost, f32 accumulator."""
    k = pl.program_id(2)

    @pl.when(k == 0)
    def _init():
        acc_ref[...] = jnp.zeros_like(acc_ref)

    acc_ref[...] += jax.lax.dot_general(
        x_ref[...], w_ref[...],
        dimension_numbers=(((1,), (1,)), ((), ())),
        preferred_element_type=jnp.float32,
    )

    @pl.when(k == pl.num_programs(2) - 1)
    def _writeback():
        o_ref[...] = (acc_ref[...] + b_ref[...]).astype(o_ref.dtype)


# ----------------------------------------------------------------------------
# One-time weight preparation (fold wn scale, pad, cast to bf16)
# ----------------------------------------------------------------------------
def prepare_classifier(params, cls_type="linear", *, block_c=256, block_k=2048):
    """Pre-materialize padded bf16 effective weights + padded f32 bias (call once)."""
    if cls_type == "wn":
        v = params["v"].astype(jnp.float32)
        g = params["g"].astype(jnp.float32)
        scale = g * jax.lax.rsqrt(jnp.sum(v * v, axis=-1) + _WN_EPS)
        w = scale[:, None] * v                      # effective weight in f32, cast once below
    else:
        w = params["w"].astype(jnp.float32)
    b = params["b"].astype(jnp.float32)

    C, D = w.shape
    tc = min(block_c, _round_up(C, 128))
    tk = min(block_k, _round_up(D, 128))
    Cp = _round_up(C, tc)
    Dp = _round_up(D, tk)

    w_p = jnp.pad(w, ((0, Cp - C), (0, Dp - D))).astype(MXU_DTYPE)
    b_p = jnp.pad(b, (0, Cp - C)).reshape(1, Cp)

    return dict(w_p=w_p, b_p=b_p, C=C, D=D, Cp=Cp, Dp=Dp, tc=tc, tk=tk)


# ----------------------------------------------------------------------------
# Forward
# ----------------------------------------------------------------------------
def feat_classifier_forward(x, prepared, *, block_b=256, x_resident_bytes=8 << 20):
    """x: (B, D) -> (B, C). `prepared` comes from prepare_classifier."""
    B, D = x.shape
    assert D == prepared["D"], "feature dim mismatch"
    C, Cp, Dp = prepared["C"], prepared["Cp"], prepared["Dp"]
    tc, tk = prepared["tc"], prepared["tk"]
    w_p, b_p = prepared["w_p"], prepared["b_p"]
    out_dtype = x.dtype
    out_bytes = jnp.dtype(out_dtype).itemsize

    Bp = _round_up(B, 16)                                   # bf16 vreg packing is (16, 128)
    x_p = jnp.pad(x, ((0, Bp - B), (0, Dp - D))).astype(MXU_DTYPE)

    n_ct = Cp // tc
    use_simple = (tk == Dp) and (Bp * Dp * 2 <= x_resident_bytes)

    if use_simple:
        cost = pl.CostEstimate(
            flops=2 * Bp * Cp * Dp, transcendentals=0,
            bytes_accessed=x_p.size * 2 + w_p.size * 2 + b_p.size * 4 + Bp * Cp * out_bytes)
        out = pl.pallas_call(
            _linear_full_k_kernel,
            out_shape=jax.ShapeDtypeStruct((Bp, Cp), out_dtype),
            grid_spec=pltpu.PrefetchScalarGridSpec(
                num_scalar_prefetch=0,
                grid=(n_ct,),
                in_specs=[
                    pl.BlockSpec((Bp, Dp), lambda j: (0, 0)),   # x: fully resident
                    pl.BlockSpec((tc, Dp), lambda j: (j, 0)),   # weights: streamed once
                    pl.BlockSpec((1, tc), lambda j: (0, j)),    # bias
                ],
                out_specs=pl.BlockSpec((Bp, tc), lambda j: (0, j)),
            ),
            compiler_params=pltpu.CompilerParams(dimension_semantics=("parallel",)),
            cost_estimate=cost,
        )(x_p, w_p, b_p)
    else:
        tb = min(block_b, Bp)
        Bp2 = _round_up(Bp, tb)
        if Bp2 != Bp:
            x_p = jnp.pad(x_p, ((0, Bp2 - Bp), (0, 0)))
            Bp = Bp2
        grid = (n_ct, Bp // tb, Dp // tk)                      # K innermost
        cost = pl.CostEstimate(
            flops=2 * Bp * Cp * Dp, transcendentals=0,
            bytes_accessed=x_p.size * 2 + w_p.size * 2 + b_p.size * 4 + Bp * Cp * out_bytes)
        out = pl.pallas_call(
            _linear_tiled_kernel,
            out_shape=jax.ShapeDtypeStruct((Bp, Cp), out_dtype),
            grid_spec=pltpu.PrefetchScalarGridSpec(
                num_scalar_prefetch=0,
                grid=grid,
                in_specs=[
                    pl.BlockSpec((tb, tk), lambda j, i, k: (i, k)),
                    pl.BlockSpec((tc, tk), lambda j, i, k: (j, k)),
                    pl.BlockSpec((1, tc), lambda j, i, k: (0, j)),
                ],
                out_specs=pl.BlockSpec((tb, tc), lambda j, i, k: (i, j)),
                scratch_shapes=[pltpu.VMEM((tb, tc), jnp.float32)],
            ),
            compiler_params=pltpu.CompilerParams(
                dimension_semantics=("parallel", "parallel", "arbitrary")),
            cost_estimate=cost,
        )(x_p, w_p, b_p)

    return out[:B, :C]


def init_params(key, class_num, bottleneck_dim, cls_type="linear"):
    """Deterministic synthetic init (mimics nn.Linear shapes)."""
    k1, k2, _ = jax.random.split(key, 3)
    bound = 1.0 / jnp.sqrt(bottleneck_dim)
    w = jax.random.uniform(k1, (class_num, bottleneck_dim), jnp.float32, -bound, bound)
    b = jax.random.uniform(k2, (class_num,), jnp.float32, -bound, bound)
    if cls_type == "wn":
        # weight_norm re-parameterization: v = w, g = ||w||_row (so w_eff == w at init)
        g = jnp.sqrt(jnp.sum(w * w, axis=-1))
        return {"v": w, "g": g, "b": b}
    return {"w": w, "b": b}


# ----------------------------------------------------------------------------
# Main
# ----------------------------------------------------------------------------
if __name__ == "__main__":
    key = jax.random.PRNGKey(0)
    kx, kp1, kp2 = jax.random.split(key, 3)

    batch, bottleneck_dim, class_num = 8, 256, 16
    x = jax.random.normal(kx, (batch, bottleneck_dim), jnp.float32)

    # type='linear' (default) — exercises the fast (x-resident, K-collapsed) path.
    params_lin = init_params(kp1, class_num, bottleneck_dim, "linear")
    prep_lin = prepare_classifier(params_lin, "linear")
    out_lin = jax.block_until_ready(feat_classifier_forward(x, prep_lin))
    ref_lin = x @ params_lin["w"].T + params_lin["b"]
    assert out_lin.shape == (batch, class_num)
    assert jnp.allclose(out_lin, ref_lin, atol=5e-2, rtol=5e-2), \
        float(jnp.max(jnp.abs(out_lin - ref_lin)))

    # type='wn' — scale folded into the weights at prepare time, same kernel.
    params_wn = init_params(kp2, class_num, bottleneck_dim, "wn")
    prep_wn = prepare_classifier(params_wn, "wn")
    out_wn = jax.block_until_ready(feat_classifier_forward(x, prep_wn))
    v, g, b = params_wn["v"], params_wn["g"], params_wn["b"]
    w_eff = (g[:, None] / jnp.sqrt(jnp.sum(v * v, axis=-1, keepdims=True))) * v
    ref_wn = x @ w_eff.T + b
    assert out_wn.shape == (batch, class_num)
    assert jnp.allclose(out_wn, ref_wn, atol=5e-2, rtol=5e-2), \
        float(jnp.max(jnp.abs(out_wn - ref_wn)))

    # Also exercise the general tiled (K-split, accumulator) path.
    prep_tiled = prepare_classifier(params_lin, "linear", block_k=128)
    out_tiled = jax.block_until_ready(feat_classifier_forward(x, prep_tiled))
    assert out_tiled.shape == (batch, class_num)
    assert jnp.allclose(out_tiled, ref_lin, atol=5e-2, rtol=5e-2), \
        float(jnp.max(jnp.abs(out_tiled - ref_lin)))

    print("KERNEL_OK")
</pallas_src>

<mosaic_0001>
module attributes {stable_mosaic.version = 11 : i64} {
  func.func @_linear_full_k_kernel(%arg0: i32, %arg1: memref<16x256xbf16, #tpu.memory_space<vmem>>, %arg2: memref<128x256xbf16, #tpu.memory_space<vmem>>, %arg3: memref<1x128xf32, #tpu.memory_space<vmem>>, %arg4: memref<16x128xf32, #tpu.memory_space<vmem>>) attributes {dimension_semantics = [#tpu.dimension_semantics<parallel>], iteration_bounds = array<i64: 1>, scalar_prefetch = 0 : i64, scratch_operands = 0 : i64, tpu.core_type = #tpu.core_type<tc>, window_params = [{pipeline_mode = #tpu.pipeline_mode<synchronous>, transform_indices = @transform_0, window_bounds = array<i64: 16, 256>}, {transform_indices = @transform_1, window_bounds = array<i64: 128, 256>}, {transform_indices = @transform_2, window_bounds = array<i64: 1, 128>}, {transform_indices = @transform_3, window_bounds = array<i64: 16, 128>}]} {
    %c0 = arith.constant 0 : index
    %c0_0 = arith.constant 0 : index
    %0 = vector.load %arg1[%c0, %c0_0] : memref<16x256xbf16, #tpu.memory_space<vmem>>, vector<16x256xbf16>
    %c0_1 = arith.constant 0 : index
    %c0_2 = arith.constant 0 : index
    %1 = vector.load %arg2[%c0_1, %c0_2] : memref<128x256xbf16, #tpu.memory_space<vmem>>, vector<128x256xbf16>
    %cst = arith.constant dense<0.000000e+00> : vector<16x128xf32>
    %2 = tpu.matmul %0, %1, %cst {dimension_numbers = #tpu.dot_dimension_numbers<[1], [1], [0], [0], [0, 0, 1, 0], [], []>} : vector<16x256xbf16>, vector<128x256xbf16>, vector<16x128xf32> -> vector<16x128xf32>
    %c0_3 = arith.constant 0 : index
    %c0_4 = arith.constant 0 : index
    %3 = vector.load %arg3[%c0_3, %c0_4] : memref<1x128xf32, #tpu.memory_space<vmem>>, vector<1x128xf32>
    %4 = vector.broadcast %3 : vector<1x128xf32> to vector<16x128xf32>
    %5 = arith.addf %2, %4 : vector<16x128xf32>
    %c0_5 = arith.constant 0 : index
    %c0_6 = arith.constant 0 : index
    %6 = vector.load %arg4[%c0_5, %c0_6] : memref<16x128xf32, #tpu.memory_space<vmem>>, vector<16x128xf32>
    tpu.vector_store %arg4[%c0_5, %c0_6], %5 {strides = array<i32>} : memref<16x128xf32, #tpu.memory_space<vmem>>, vector<16x128xf32>,
    return
  }
  func.func @transform_0(%arg0: i32) -> (i32, i32) {
    %c0_i32 = arith.constant 0 : i32
    %c0_i32_0 = arith.constant 0 : i32
    %c0_i32_1 = arith.constant 0 : i32
    return %c0_i32, %c0_i32_0 : i32, i32
  }
  func.func @transform_1(%arg0: i32) -> (i32, i32) {
    %c0_i32 = arith.constant 0 : i32
    %c0_i32_0 = arith.constant 0 : i32
    return %arg0, %c0_i32 : i32, i32
  }
  func.func @transform_2(%arg0: i32) -> (i32, i32) {
    %c0_i32 = arith.constant 0 : i32
    %c0_i32_0 = arith.constant 0 : i32
    return %c0_i32, %arg0 : i32, i32
  }
  func.func @transform_3(%arg0: i32) -> (i32, i32) {
    %c0_i32 = arith.constant 0 : i32
    %c0_i32_0 = arith.constant 0 : i32
    return %c0_i32, %arg0 : i32, i32
  }
}

</mosaic_0001>

<llo_original>
// kernel: tpu_custom_call.1
$region0: #{tpu_custom_call.1}
  #allocation0 [shape = 'u32[]', space=smem, size = 0x4, offset = 0x4, fixed_abs, tag = 'smem constant byte address 0x4 - core index']
  #allocation1 [shape = 'u32[144,128]{1,0:T(1,128)}', space=vmem, size = 0x12000, scoped, tag = 'internal scratch']
  %s0 = inlined_call_operand.hbm [shape: bf16[16,256], index: 0, kind: input, shape index: {}]
  %s1 = inlined_call_operand.hbm [shape: bf16[128,256], index: 1, kind: input, shape index: {}]
  %s2 = inlined_call_operand.vmem [shape: f32[1,128], index: 2, kind: input, shape index: {}]
  %s3 = inlined_call_operand.hbm [shape: f32[16,128], index: 3, kind: output, shape index: {}]
  %s4 = sld [smem:[#allocation0]]
  $region30: #{tpu_custom_call.1} parent=0
    _
  %s6 = ssub.s32 1, %s4
  %s7 = scalar_select 0, %s6, %s4
  $region1: #{tpu_custom_call.1} parent=0
    #allocation2 [shape = 'u8[8192]{0}', space=vmem, size = 0x2000, scoped, tag = 'input window, operand 0, single buffered']
    #allocation3 [shape = 's32[1]{0}', space=sflag, size = 0x4, scoped, tag = 'scoped memory for tpu_custom_call.1']
    #allocation4 [shape = 's32[1]{0}', space=sflag, size = 0x4, scoped, tag = 'scoped memory for tpu_custom_call.1']
    #allocation5 [shape = 'u8[65536]{0}', space=vmem, size = 0x10000, scoped, tag = 'input window, operand 1, single buffered']
    #allocation6 [shape = 's32[1]{0}', space=sflag, size = 0x4, scoped, tag = 'scoped memory for tpu_custom_call.1']
    #allocation7 [shape = 'u8[8192]{0}', space=vmem, size = 0x2000, scoped, tag = 'output window, operand 0, single buffered']
    %8 = vsyncpa [#allocation3], 0
    %9 = vsyncpa [#allocation6], 0
    %10 = vsyncpa [#allocation4], 0
    // Predicated region
    $region2: #{tpu_custom_call.1} parent=1 // pred_check
      _
    $region3: #{tpu_custom_call.1} parent=1 // pred_check_branch
      %12 = sbr.rel (0) target = $region5
    $region4: #{tpu_custom_call.1} parent=1 // pred_region
      %s14 = ssub.s32 256, 256
      %15 = vsyncadd [#allocation3], %s14
      %s16 = sshll.u32 [#allocation2], 4
      %s17 = int_to_ptr.vmem [resolvable:$true] %s16
      %22 = dma.hbm_to_vmem [thread:$0]  %s0, 256, %s17, [#allocation3], 128, 128, 8
    $region5: #{tpu_custom_call.1} parent=1 // pred_fallthru
      _
    // Predicated region
    $region6: #{tpu_custom_call.1} parent=1 // pred_check
      _
    $region7: #{tpu_custom_call.1} parent=1 // pred_check_branch
      %24 = sbr.rel (0) target = $region9
    $region8: #{tpu_custom_call.1} parent=1 // pred_region
      %s26 = ssub.s32 2048, 2048
      %27 = vsyncadd [#allocation6], %s26
      %s28 = sshll.u32 [#allocation5], 4
      %s29 = int_to_ptr.vmem [resolvable:$true] %s28
      %34 = dma.hbm_to_vmem [thread:$0]  %s1, 2048, %s29, [#allocation6], 128, 128, 8
    $region9: #{tpu_custom_call.1} parent=1 // pred_fallthru
      _
    // Predicated region
    $region10: #{tpu_custom_call.1} parent=1 // pred_check
      _
    $region11: #{tpu_custom_call.1} parent=1 // pred_check_branch
      %36 = sbr.rel (0) target = $region13
    $region12: #{tpu_custom_call.1} parent=1 // pred_region
      _
    $region13: #{tpu_custom_call.1} parent=1 // pred_fallthru
      _
    // Predicated region
    $region14: #{tpu_custom_call.1} parent=1 // pred_check
      _
    $region15: #{tpu_custom_call.1} parent=1 // pred_check_branch
      %38 = sbr.rel (0) target = $region17
    $region16: #{tpu_custom_call.1} parent=1 // pred_region
      %39 = dma.done [#allocation3], 256
    $region17: #{tpu_custom_call.1} parent=1 // pred_fallthru
      _
    // Predicated region
    $region18: #{tpu_custom_call.1} parent=1 // pred_check
      _
    $region19: #{tpu_custom_call.1} parent=1 // pred_check_branch
      %41 = sbr.rel (0) target = $region21
    $region20: #{tpu_custom_call.1} parent=1 // pred_region
      %42 = dma.done [#allocation6], 2048
    $region21: #{tpu_custom_call.1} parent=1 // pred_fallthru
      _
    %v44 = vld [vmem:[#allocation2] sm:$0xff]
    %v45 = vld [vmem:[#allocation2 + $0x8] sm:$0xff]
    %v46 = vld [vmem:[#allocation5] sm:$0xff]
    %v47 = vld [vmem:[#allocation5 + $0x8] sm:$0xff]
    %v48 = vld [vmem:[#allocation5 + $0x10] sm:$0xff]
    %v49 = vld [vmem:[#allocation5 + $0x18] sm:$0xff]
    %v50 = vld [vmem:[#allocation5 + $0x20] sm:$0xff]
    %v51 = vld [vmem:[#allocation5 + $0x28] sm:$0xff]
    %v52 = vld [vmem:[#allocation5 + $0x30] sm:$0xff]
    %v53 = vld [vmem:[#allocation5 + $0x38] sm:$0xff]
    %v54 = vld [vmem:[#allocation5 + $0x40] sm:$0xff]
    %v55 = vld [vmem:[#allocation5 + $0x48] sm:$0xff]
    %v56 = vld [vmem:[#allocation5 + $0x50] sm:$0xff]
    %v57 = vld [vmem:[#allocation5 + $0x58] sm:$0xff]
    %v58 = vld [vmem:[#allocation5 + $0x60] sm:$0xff]
    %v59 = vld [vmem:[#allocation5 + $0x68] sm:$0xff]
    %v60 = vld [vmem:[#allocation5 + $0x70] sm:$0xff]
    %v61 = vld [vmem:[#allocation5 + $0x78] sm:$0xff]
    %v62 = vld [vmem:[%s2] sm:$0x1]
    %v64 = vlaneseq
    %v65 = vshrl.u32 %v64, 7
    %v66 = vsub.s32 0, %v65
    %v67 = vrot.slane %v62, %v66
    %v71 = vunpack.c.l.b16 %v44
    %v72 = vunpack.c.h.b16 %v44
    %v73 = vunpack.c.l.b16 %v45
    %v74 = vunpack.c.h.b16 %v45
    %v75 = vpack.c.b16 %v73, %v71
    %v76 = vpack.c.b16 %v74, %v72
    %v95 = vunpack.c.l.b16 %v46
    %v96 = vunpack.c.h.b16 %v46
    %v97 = vunpack.c.l.b16 %v47
    %v98 = vunpack.c.h.b16 %v47
    %v99 = vunpack.c.l.b16 %v48
    %v100 = vunpack.c.h.b16 %v48
    %v101 = vunpack.c.l.b16 %v49
    %v102 = vunpack.c.h.b16 %v49
    %v103 = vunpack.c.l.b16 %v50
    %v104 = vunpack.c.h.b16 %v50
    %v105 = vunpack.c.l.b16 %v51
    %v106 = vunpack.c.h.b16 %v51
    %v107 = vunpack.c.l.b16 %v52
    %v108 = vunpack.c.h.b16 %v52
    %v109 = vunpack.c.l.b16 %v53
    %v110 = vunpack.c.h.b16 %v53
    %v111 = vunpack.c.l.b16 %v54
    %v112 = vunpack.c.h.b16 %v54
    %v113 = vunpack.c.l.b16 %v55
    %v114 = vunpack.c.h.b16 %v55
    %v115 = vunpack.c.l.b16 %v56
    %v116 = vunpack.c.h.b16 %v56
    %v117 = vunpack.c.l.b16 %v57
    %v118 = vunpack.c.h.b16 %v57
    %v119 = vunpack.c.l.b16 %v58
    %v120 = vunpack.c.h.b16 %v58
    %v121 = vunpack.c.l.b16 %v59
    %v122 = vunpack.c.h.b16 %v59
    %v123 = vunpack.c.l.b16 %v60
    %v124 = vunpack.c.h.b16 %v60
    %v125 = vunpack.c.l.b16 %v61
    %v126 = vunpack.c.h.b16 %v61
    %v127 = vpack.c.b16 %v97, %v95
    %v128 = vpack.c.b16 %v98, %v96
    %v129 = vpack.c.b16 %v101, %v99
    %v130 = vpack.c.b16 %v102, %v100
    %v131 = vpack.c.b16 %v105, %v103
    %v132 = vpack.c.b16 %v106, %v104
    %v133 = vpack.c.b16 %v109, %v107
    %v134 = vpack.c.b16 %v110, %v108
    %v135 = vpack.c.b16 %v113, %v111
    %v136 = vpack.c.b16 %v114, %v112
    %v137 = vpack.c.b16 %v117, %v115
    %v138 = vpack.c.b16 %v118, %v116
    %v139 = vpack.c.b16 %v121, %v119
    %v140 = vpack.c.b16 %v122, %v120
    %v141 = vpack.c.b16 %v125, %v123
    %v142 = vpack.c.b16 %v126, %v124
    %159 = vmatprep.subr.bf16.mxu0 %v128
    %160 = vmatpush1.bf16.xpose.msra.mxu0 %v127
    %161 = vmatprep.subr.bf16.mxu0 %v130
    %162 = vmatpush1.bf16.xpose.msra.mxu0 %v129
    %163 = vmatprep.subr.bf16.mxu0 %v132
    %164 = vmatpush1.bf16.xpose.msra.mxu0 %v131
    %165 = vmatprep.subr.bf16.mxu0 %v134
    %166 = vmatpush1.bf16.xpose.msra.mxu0 %v133
    %167 = vmatprep.subr.bf16.mxu0 %v136
    %168 = vmatpush1.bf16.xpose.msra.mxu0 %v135
    %169 = vmatprep.subr.bf16.mxu0 %v138
    %170 = vmatpush1.bf16.xpose.msra.mxu0 %v137
    %171 = vmatprep.subr.bf16.mxu0 %v140
    %172 = vmatpush1.bf16.xpose.msra.mxu0 %v139
    %173 = vmatprep.subr.bf16.mxu0 %v142
    %174 = vmatpush1.bf16.xpose.msra.mxu0 %v141
    %175 = vmatprep.subr.bf16.mxu0 0
    %176 = vmatpush1.bf16.xpose.msra.mxu0 0
    %177 = vmatprep.subr.bf16.mxu0 0
    %178 = vmatpush1.bf16.xpose.msra.mxu0 0
    %179 = vmatprep.subr.bf16.mxu0 0
    %180 = vmatpush1.bf16.xpose.msra.mxu0 0
    %181 = vmatprep.subr.bf16.mxu0 0
    %182 = vmatpush1.bf16.xpose.msra.mxu0 0
    %183 = vmatprep.subr.bf16.mxu0 0
    %184 = vmatpush1.bf16.xpose.msra.mxu0 0
    %185 = vmatprep.subr.bf16.mxu0 0
    %186 = vmatpush1.bf16.xpose.msra.mxu0 0
    %187 = vmatprep.subr.bf16.mxu0 0
    %188 = vmatpush1.bf16.xpose.msra.mxu0 0
    %189 = vmatprep.subr.bf16.mxu0 0
    %190 = vmatpush1.bf16.xpose.msra.mxu0 0
    %191 = vmatprep.mubr.bf16.mxu0 %v76
    %192 = vmatmul.mubr.bf16.gmra.mrb[0].mxu0 %v75
    %v193 = vpop.f32.mrb[0].mxu0
    %v194 = vadd.f32 %v67, %v193
    %v195 = vpop.f32.mrb[0].mxu0
    %v196 = vpop.f32.mrb[0].mxu0
    %v197 = vadd.f32 %v67, %v196
    %v198 = vpop.f32.mrb[0].mxu0
    %199 = vdwg.mxu0
    %200 = vst [vmem:[#allocation7] sm:$0xff] %v194
    %201 = vst [vmem:[#allocation7 + $0x8] sm:$0xff] %v197
    // Predicated region
    $region22: #{tpu_custom_call.1} parent=1 // pred_check
      _
    $region23: #{tpu_custom_call.1} parent=1 // pred_check_branch
      %203 = sbr.rel (0) target = $region25
    $region24: #{tpu_custom_call.1} parent=1 // pred_region
      %s205 = ssub.s32 256, 256
      %206 = vsyncadd [#allocation4], %s205
      %s207 = sshll.u32 [#allocation7], 4
      %s208 = int_to_ptr.vmem [resolvable:$true] %s207
      %213 = dma.vmem_to_hbm [thread:$0]  %s208, 256, %s3, [#allocation4], 128, 128, 8
    $region25: #{tpu_custom_call.1} parent=1 // pred_fallthru
      _
    // Predicated region
    $region26: #{tpu_custom_call.1} parent=1 // pred_check
      _
    $region27: #{tpu_custom_call.1} parent=1 // pred_check_branch
      %215 = sbr.rel (0) target = $region29
    $region28: #{tpu_custom_call.1} parent=1 // pred_region
      %216 = dma.done [#allocation4], 256
    $region29: #{tpu_custom_call.1} parent=1 // pred_fallthru
      _
    %217 = vsyncpa [#allocation3], 1
    %218 = vsyncpa [#allocation6], 1
    %219 = vsyncpa [#allocation4], 1

</llo_original>
